<compile_context>
chip_gen: v7x
topology: tpu7x:2x2x1
jax: 0.10.0
libtpu: 0.0.40
codegen_flags: <defaults>
</compile_context>

<pallas_src>
import functools

import jax
import jax.numpy as jnp
from jax import lax
from jax.experimental import pallas as pl
from jax.experimental.pallas import tpu as pltpu

_EPS = 1e-5


def _round_up(a, b):
    return ((a + b - 1) // b) * b


# --------------------------------------------------------------------------
# Kernels
# --------------------------------------------------------------------------
def _skip_kernel_plain(x_ref, y_ref, g_ref, b_ref, o_ref, *, d):
    """out = x + (LayerNorm(y) * gamma + beta); one LayerNorm row per tile row."""
    y = y_ref[...].astype(jnp.float32)
    inv_d = 1.0 / d
    s1 = jnp.sum(y, axis=-1, keepdims=True) * inv_d            # mean
    s2 = jnp.sum(y * y, axis=-1, keepdims=True) * inv_d        # E[y^2]
    inv_std = lax.rsqrt(jnp.maximum(s2 - s1 * s1, 0.0) + _EPS)
    ln = (y - s1) * inv_std * g_ref[...] + b_ref[...]
    # TODO(synk): training-mode dropout (p=0.2) would use pltpu.prng_seed +
    # pltpu.stateful_bernoulli with 1/(1-p) scaling; eval mode is identity.
    o_ref[...] = x_ref[...] + ln.astype(o_ref.dtype)


def _skip_kernel_packed(x_ref, y_ref, g_ref, b_ref, scat_ref, gath_ref, o_ref,
                        *, d):
    """Lane-packed variant: each tile row holds `pack = lw // d` independent
    LayerNorm rows of width d, packed along the lane axis.  Per-segment
    reductions / broadcasts use the VMEM-resident one-hot scatter (lw, pack)
    and gather (pack, lw) matrices on the otherwise-idle MXU."""
    y = y_ref[...].astype(jnp.float32)
    inv_d = 1.0 / d
    scatter = scat_ref[...]                                    # (lw, pack)
    gather = gath_ref[...]                                     # (pack, lw)
    s1 = jnp.dot(y, scatter, preferred_element_type=jnp.float32) * inv_d
    s2 = jnp.dot(y * y, scatter, preferred_element_type=jnp.float32) * inv_d
    inv_std = lax.rsqrt(jnp.maximum(s2 - s1 * s1, 0.0) + _EPS)  # (TM, pack)
    mean_b = jnp.dot(s1, gather, preferred_element_type=jnp.float32)     # (TM, lw)
    istd_b = jnp.dot(inv_std, gather, preferred_element_type=jnp.float32)
    ln = (y - mean_b) * istd_b * g_ref[...] + b_ref[...]
    # TODO(synk): training-mode dropout (p=0.2) via pltpu.prng_seed +
    # pltpu.stateful_bernoulli with 1/(1-p) scaling; eval mode is identity.
    o_ref[...] = x_ref[...] + ln.astype(o_ref.dtype)


# --------------------------------------------------------------------------
# Tiling / VMEM sizing
# --------------------------------------------------------------------------
def _vmem_capacity_bytes():
    try:
        return int(pltpu.get_tpu_info().vmem_capacity_bytes)
    except Exception:
        return 64 * 1024 * 1024   # conservative (v7x-sized) fallback


def _gen_budgets(vmem_cap):
    if vmem_cap <= 64 * 1024 * 1024:
        # v7x-class: 64 MiB physical VMEM per TensorCore.
        return 52 * 1024 * 1024, 4 * 1024 * 1024
    # v5e / v6e: 128 MiB physical VMEM.
    return 96 * 1024 * 1024, 8 * 1024 * 1024


def _choose_tile_rows(nrows, lane_width, itemsize, sublane, vmem_cap):
    total_budget, operand_cap = _gen_budgets(vmem_cap)
    # Per grid step (accounted, not guessed):
    #   * 3 I/O operands (x, y, out), double-buffered, in the input dtype
    #   * ~4 full-tile f32 temporaries materialized by the kernel body
    #     (y_f32, mean/inv_std broadcasts, ln).
    bytes_per_row = lane_width * (2 * 3 * itemsize + 4 * 4)
    max_rows = max(sublane,
                   (min(total_budget // bytes_per_row,
                        operand_cap // (lane_width * itemsize))
                    // sublane) * sublane)
    if max_rows >= nrows:
        return nrows                      # single block == full array (legal)

    # Multi-step: keep the realized step count even so the parallel grid axis
    # shards evenly across v7x's two TensorCores (harmless on 1-TC chips).
    rows = max_rows
    steps = pl.cdiv(nrows, max_rows)
    for _ in range(4):
        if steps % 2:
            steps += 1
        rows = min(max_rows,
                   max(sublane, _round_up(pl.cdiv(nrows, steps), sublane)))
        realized = pl.cdiv(nrows, rows)
        if realized % 2 == 0 or realized <= 1 or rows <= sublane:
            return rows
        steps = realized
    return rows


# --------------------------------------------------------------------------
# Wrapper
# --------------------------------------------------------------------------
def skip_connection(x, y, gamma, beta, *, tile_rows=None):
    """z = x + dropout(LayerNorm(y) * gamma + beta), dropout in eval mode."""
    assert x.shape == y.shape
    orig_shape = x.shape
    d = orig_shape[-1]
    assert gamma.shape[-1] == d and beta.shape[-1] == d

    x2 = x.reshape(-1, d)
    y2 = y.reshape(-1, d)
    n = x2.shape[0]

    # Lane-dense packing: for small d dividing 128, pack 128//d LayerNorm rows
    # into one 128-lane row so loads/stores use full vregs (unmasked vst).
    # TODO(synk): when n % (128//d) != 0, run the divisible row-prefix through
    # the packed path and only the <pack remainder rows through the plain path
    # (layout-preserving slices, no jnp.pad copy) instead of falling back.
    pack = 1
    if d < 128 and 128 % d == 0 and n % (128 // d) == 0:
        pack = 128 // d
    lw = pack * d                 # lane width of the kernel tiles
    nrows = n // pack
    x2 = x2.reshape(nrows, lw)
    y2 = y2.reshape(nrows, lw)

    g2 = jnp.tile(gamma.astype(jnp.float32).reshape(-1), pack).reshape(1, lw)
    b2 = jnp.tile(beta.astype(jnp.float32).reshape(-1), pack).reshape(1, lw)

    itemsize = jnp.dtype(x.dtype).itemsize
    sublane = max(8, 32 // itemsize)        # 8 for f32, 16 for bf16, ...
    vmem_cap = _vmem_capacity_bytes()
    total_budget, _ = _gen_budgets(vmem_cap)

    if tile_rows is None:
        tile_rows = _choose_tile_rows(nrows, lw, itemsize, sublane, vmem_cap)
    else:
        tile_rows = max(sublane, _round_up(int(tile_rows), sublane))
    if tile_rows >= nrows:
        tile_rows = nrows                   # block == full array dim: legal

    grid = (pl.cdiv(nrows, tile_rows),)
    vmem_limit = int(total_budget)          # < physical VMEM on every gen

    tile_spec = pl.BlockSpec((tile_rows, lw), lambda i: (i, 0))
    vec_spec = pl.BlockSpec((1, lw), lambda i: (0, 0))          # resident

    if pack == 1:
        kernel = functools.partial(_skip_kernel_plain, d=d)
        in_specs = [tile_spec, tile_spec, vec_spec, vec_spec]
        args = (x2, y2, g2, b2)
    else:
        # One-hot segment matrices, built once here (not per grid step):
        #   scatter (lw, pack): reduces lanes into per-segment sums.
        #   gather  (pack, lw): broadcasts per-segment values back to lanes.
        lane_s = lax.broadcasted_iota(jnp.int32, (lw, pack), 0) // d
        seg_s = lax.broadcasted_iota(jnp.int32, (lw, pack), 1)
        scatter = (lane_s == seg_s).astype(jnp.float32)
        seg_g = lax.broadcasted_iota(jnp.int32, (pack, lw), 0)
        lane_g = lax.broadcasted_iota(jnp.int32, (pack, lw), 1) // d
        gather = (seg_g == lane_g).astype(jnp.float32)

        kernel = functools.partial(_skip_kernel_packed, d=d)
        in_specs = [tile_spec, tile_spec, vec_spec, vec_spec,
                    pl.BlockSpec((lw, pack), lambda i: (0, 0)),  # resident
                    pl.BlockSpec((pack, lw), lambda i: (0, 0))]  # resident
        args = (x2, y2, g2, b2, scatter, gather)

    out = pl.pallas_call(
        kernel,
        out_shape=jax.ShapeDtypeStruct((nrows, lw), x.dtype),
        grid_spec=pl.GridSpec(
            grid=grid,
            in_specs=in_specs,
            out_specs=pl.BlockSpec((tile_rows, lw), lambda i: (i, 0)),
        ),
        compiler_params=pltpu.CompilerParams(
            dimension_semantics=("parallel",),
            vmem_limit_bytes=vmem_limit,
        ),
    )(*args)
    return out.reshape(orig_shape)


# --------------------------------------------------------------------------
# Self-test
# --------------------------------------------------------------------------
if __name__ == "__main__":
    def reference(x, y, gamma, beta):
        yf = y.astype(jnp.float32)
        mean = jnp.mean(yf, axis=-1, keepdims=True)
        var = jnp.mean((yf - mean) ** 2, axis=-1, keepdims=True)
        ln = (yf - mean) * lax.rsqrt(var + _EPS) * gamma + beta
        return (x.astype(jnp.float32) + ln).astype(x.dtype)

    # Case 1: small hidden dim (D=32) -> lane-packed path (4 rows / 128 lanes).
    B, S, D = 2, 8, 32
    key = jax.random.PRNGKey(0)
    kx, ky = jax.random.split(key)
    x = jax.random.normal(kx, (B, S, D), dtype=jnp.float32)
    y = jax.random.normal(ky, (B, S, D), dtype=jnp.float32)
    gamma = jnp.ones((D,), jnp.float32) + 0.01 * jnp.arange(D, dtype=jnp.float32)
    beta = 0.001 * jnp.arange(D, dtype=jnp.float32)

    z = jax.block_until_ready(skip_connection(x, y, gamma, beta))
    assert jnp.allclose(z, reference(x, y, gamma, beta), atol=2e-5, rtol=1e-5), \
        "mismatch vs reference (packed path)"

    # Case 2: lane-dense hidden dim (D=128) with a row count that is not a
    # multiple of the tile -> exercises the pl.cdiv grid / masked tail block.
    B2, S2, D2 = 2, 17, 128
    kx2, ky2 = jax.random.split(jax.random.PRNGKey(1))
    xb = jax.random.normal(kx2, (B2, S2, D2), dtype=jnp.float32)
    yb = jax.random.normal(ky2, (B2, S2, D2), dtype=jnp.float32)
    gb = jnp.ones((D2,), jnp.float32) + 0.01 * jnp.arange(D2, dtype=jnp.float32)
    bb = 0.001 * jnp.arange(D2, dtype=jnp.float32)

    zb = jax.block_until_ready(skip_connection(xb, yb, gb, bb, tile_rows=16))
    assert jnp.allclose(zb, reference(xb, yb, gb, bb), atol=2e-5, rtol=1e-5), \
        "mismatch vs reference (plain path, partial tail block)"

    # Case 3: bf16 inputs -> exercises itemsize=2 tile sizing (sublane=16) and
    # the residual add in the input dtype.
    xc = x.astype(jnp.bfloat16)
    yc = y.astype(jnp.bfloat16)
    zc = jax.block_until_ready(skip_connection(xc, yc, gamma, beta))
    assert jnp.allclose(zc.astype(jnp.float32),
                        reference(xc, yc, gamma, beta).astype(jnp.float32),
                        atol=1e-1, rtol=5e-2), \
        "mismatch vs reference (bf16 packed path)"

    print("KERNEL_OK")
</pallas_src>

<mosaic_0001>
module attributes {stable_mosaic.version = 11 : i64} {
  func.func @_skip_kernel_packed(%arg0: i32, %arg1: memref<4x128xf32, #tpu.memory_space<vmem>>, %arg2: memref<4x128xf32, #tpu.memory_space<vmem>>, %arg3: memref<1x128xf32, #tpu.memory_space<vmem>>, %arg4: memref<1x128xf32, #tpu.memory_space<vmem>>, %arg5: memref<128x4xf32, #tpu.memory_space<vmem>>, %arg6: memref<4x128xf32, #tpu.memory_space<vmem>>, %arg7: memref<4x128xf32, #tpu.memory_space<vmem>>) attributes {dimension_semantics = [#tpu.dimension_semantics<parallel>], iteration_bounds = array<i64: 1>, scalar_prefetch = 0 : i64, scratch_operands = 0 : i64, tpu.core_type = #tpu.core_type<tc>, window_params = [{transform_indices = @transform_0, window_bounds = array<i64: 4, 128>}, {transform_indices = @transform_1, window_bounds = array<i64: 4, 128>}, {pipeline_mode = #tpu.pipeline_mode<synchronous>, transform_indices = @transform_2, window_bounds = array<i64: 1, 128>}, {pipeline_mode = #tpu.pipeline_mode<synchronous>, transform_indices = @transform_3, window_bounds = array<i64: 1, 128>}, {pipeline_mode = #tpu.pipeline_mode<synchronous>, transform_indices = @transform_4, window_bounds = array<i64: 128, 4>}, {pipeline_mode = #tpu.pipeline_mode<synchronous>, transform_indices = @transform_5, window_bounds = array<i64: 4, 128>}, {transform_indices = @transform_6, window_bounds = array<i64: 4, 128>}]} {
    %c0 = arith.constant 0 : index
    %c0_0 = arith.constant 0 : index
    %0 = vector.load %arg2[%c0, %c0_0] : memref<4x128xf32, #tpu.memory_space<vmem>>, vector<4x128xf32>
    %c0_1 = arith.constant 0 : index
    %c0_2 = arith.constant 0 : index
    %1 = vector.load %arg5[%c0_1, %c0_2] : memref<128x4xf32, #tpu.memory_space<vmem>>, vector<128x4xf32>
    %c0_3 = arith.constant 0 : index
    %c0_4 = arith.constant 0 : index
    %2 = vector.load %arg6[%c0_3, %c0_4] : memref<4x128xf32, #tpu.memory_space<vmem>>, vector<4x128xf32>
    %cst = arith.constant dense<0.000000e+00> : vector<4x4xf32>
    %3 = tpu.matmul %0, %1, %cst {dimension_numbers = #tpu.dot_dimension_numbers<[1], [0], [0], [1], [0, 0, 1, 1], [], []>} : vector<4x128xf32>, vector<128x4xf32>, vector<4x4xf32> -> vector<4x4xf32>
    %cst_5 = arith.constant 3.125000e-02 : f32
    %4 = vector.broadcast %cst_5 : f32 to vector<4x4xf32>
    %5 = arith.mulf %3, %4 : vector<4x4xf32>
    %6 = arith.mulf %0, %0 : vector<4x128xf32>
    %cst_6 = arith.constant dense<0.000000e+00> : vector<4x4xf32>
    %7 = tpu.matmul %6, %1, %cst_6 {dimension_numbers = #tpu.dot_dimension_numbers<[1], [0], [0], [1], [0, 0, 1, 1], [], []>} : vector<4x128xf32>, vector<128x4xf32>, vector<4x4xf32> -> vector<4x4xf32>
    %cst_7 = arith.constant 3.125000e-02 : f32
    %8 = vector.broadcast %cst_7 : f32 to vector<4x4xf32>
    %9 = arith.mulf %7, %8 : vector<4x4xf32>
    %10 = arith.mulf %5, %5 : vector<4x4xf32>
    %11 = arith.subf %9, %10 : vector<4x4xf32>
    %cst_8 = arith.constant 0.000000e+00 : f32
    %12 = vector.broadcast %cst_8 : f32 to vector<4x4xf32>
    %13 = arith.maximumf %11, %12 : vector<4x4xf32>
    %cst_9 = arith.constant 9.99999974E-6 : f32
    %14 = vector.broadcast %cst_9 : f32 to vector<4x4xf32>
    %15 = arith.addf %13, %14 : vector<4x4xf32>
    %16 = math.rsqrt %15 : vector<4x4xf32>
    %cst_10 = arith.constant dense<0.000000e+00> : vector<4x128xf32>
    %17 = tpu.matmul %5, %2, %cst_10 {dimension_numbers = #tpu.dot_dimension_numbers<[1], [0], [0], [1], [0, 0, 1, 1], [], []>} : vector<4x4xf32>, vector<4x128xf32>, vector<4x128xf32> -> vector<4x128xf32>
    %cst_11 = arith.constant dense<0.000000e+00> : vector<4x128xf32>
    %18 = tpu.matmul %16, %2, %cst_11 {dimension_numbers = #tpu.dot_dimension_numbers<[1], [0], [0], [1], [0, 0, 1, 1], [], []>} : vector<4x4xf32>, vector<4x128xf32>, vector<4x128xf32> -> vector<4x128xf32>
    %19 = arith.subf %0, %17 : vector<4x128xf32>
    %20 = arith.mulf %19, %18 : vector<4x128xf32>
    %c0_12 = arith.constant 0 : index
    %c0_13 = arith.constant 0 : index
    %21 = vector.load %arg3[%c0_12, %c0_13] : memref<1x128xf32, #tpu.memory_space<vmem>>, vector<1x128xf32>
    %22 = vector.broadcast %21 : vector<1x128xf32> to vector<4x128xf32>
    %23 = arith.mulf %20, %22 : vector<4x128xf32>
    %c0_14 = arith.constant 0 : index
    %c0_15 = arith.constant 0 : index
    %24 = vector.load %arg4[%c0_14, %c0_15] : memref<1x128xf32, #tpu.memory_space<vmem>>, vector<1x128xf32>
    %25 = vector.broadcast %24 : vector<1x128xf32> to vector<4x128xf32>
    %26 = arith.addf %23, %25 : vector<4x128xf32>
    %c0_16 = arith.constant 0 : index
    %c0_17 = arith.constant 0 : index
    %27 = vector.load %arg1[%c0_16, %c0_17] : memref<4x128xf32, #tpu.memory_space<vmem>>, vector<4x128xf32>
    %28 = arith.addf %27, %26 : vector<4x128xf32>
    %c0_18 = arith.constant 0 : index
    %c0_19 = arith.constant 0 : index
    %29 = vector.load %arg7[%c0_18, %c0_19] : memref<4x128xf32, #tpu.memory_space<vmem>>, vector<4x128xf32>
    tpu.vector_store %arg7[%c0_18, %c0_19], %28 {strides = array<i32>} : memref<4x128xf32, #tpu.memory_space<vmem>>, vector<4x128xf32>,
    return
  }
  func.func @transform_0(%arg0: i32) -> (i32, i32) {
    %c0_i32 = arith.constant 0 : i32
    %c0_i32_0 = arith.constant 0 : i32
    return %arg0, %c0_i32 : i32, i32
  }
  func.func @transform_1(%arg0: i32) -> (i32, i32) {
    %c0_i32 = arith.constant 0 : i32
    %c0_i32_0 = arith.constant 0 : i32
    return %arg0, %c0_i32 : i32, i32
  }
  func.func @transform_2(%arg0: i32) -> (i32, i32) {
    %c0_i32 = arith.constant 0 : i32
    %c0_i32_0 = arith.constant 0 : i32
    %c0_i32_1 = arith.constant 0 : i32
    return %c0_i32, %c0_i32_0 : i32, i32
  }
  func.func @transform_3(%arg0: i32) -> (i32, i32) {
    %c0_i32 = arith.constant 0 : i32
    %c0_i32_0 = arith.constant 0 : i32
    %c0_i32_1 = arith.constant 0 : i32
    return %c0_i32, %c0_i32_0 : i32, i32
  }
  func.func @transform_4(%arg0: i32) -> (i32, i32) {
    %c0_i32 = arith.constant 0 : i32
    %c0_i32_0 = arith.constant 0 : i32
    %c0_i32_1 = arith.constant 0 : i32
    return %c0_i32, %c0_i32_0 : i32, i32
  }
  func.func @transform_5(%arg0: i32) -> (i32, i32) {
    %c0_i32 = arith.constant 0 : i32
    %c0_i32_0 = arith.constant 0 : i32
    %c0_i32_1 = arith.constant 0 : i32
    return %c0_i32, %c0_i32_0 : i32, i32
  }
  func.func @transform_6(%arg0: i32) -> (i32, i32) {
    %c0_i32 = arith.constant 0 : i32
    %c0_i32_0 = arith.constant 0 : i32
    return %arg0, %c0_i32 : i32, i32
  }
}

</mosaic_0001>

<llo_original>
// kernel: tpu_custom_call.1
$region0: #{tpu_custom_call.1}
  #allocation0 [shape = 'u32[]', space=smem, size = 0x4, offset = 0x4, fixed_abs, tag = 'smem constant byte address 0x4 - core index']
  #allocation1 [shape = 'u32[144,128]{1,0:T(1,128)}', space=vmem, size = 0x12000, scoped, tag = 'internal scratch']
  %s0 = inlined_call_operand.vmem [shape: f32[4,128], index: 0, kind: input, shape index: {}]
  %s1 = inlined_call_operand.vmem [shape: f32[4,128], index: 1, kind: input, shape index: {}]
  %s2 = inlined_call_operand.vmem [shape: f32[1,128], index: 2, kind: input, shape index: {}]
  %s3 = inlined_call_operand.vmem [shape: f32[1,128], index: 3, kind: input, shape index: {}]
  %s4 = inlined_call_operand.vmem [shape: f32[128,4], index: 4, kind: input, shape index: {}]
  %s5 = inlined_call_operand.vmem [shape: f32[4,128], index: 5, kind: input, shape index: {}]
  %s6 = inlined_call_operand.hbm [shape: f32[4,128], index: 6, kind: output, shape index: {}]
  %s7 = sld [smem:[#allocation0]]
  $region34: #{tpu_custom_call.1} parent=0
    _
  %s9 = ssub.s32 1, %s7
  %s10 = scalar_select 0, %s9, %s7
  $region1: #{tpu_custom_call.1} parent=0
    #allocation2 [shape = 'u8[2048]{0}', space=vmem, size = 0x800, scoped, tag = 'output window, operand 0, single buffered']
    #allocation3 [shape = 's32[1]{0}', space=sflag, size = 0x4, scoped, tag = 'scoped memory for tpu_custom_call.1']
    %11 = vsyncpa [#allocation3], 0
    // Predicated region
    $region2: #{tpu_custom_call.1} parent=1 // pred_check
      _
    $region3: #{tpu_custom_call.1} parent=1 // pred_check_branch
      %13 = sbr.rel (0) target = $region5
    $region4: #{tpu_custom_call.1} parent=1 // pred_region
      _
    $region5: #{tpu_custom_call.1} parent=1 // pred_fallthru
      _
    // Predicated region
    $region6: #{tpu_custom_call.1} parent=1 // pred_check
      _
    $region7: #{tpu_custom_call.1} parent=1 // pred_check_branch
      %15 = sbr.rel (0) target = $region9
    $region8: #{tpu_custom_call.1} parent=1 // pred_region
      _
    $region9: #{tpu_custom_call.1} parent=1 // pred_fallthru
      _
    // Predicated region
    $region10: #{tpu_custom_call.1} parent=1 // pred_check
      _
    $region11: #{tpu_custom_call.1} parent=1 // pred_check_branch
      %17 = sbr.rel (0) target = $region13
    $region12: #{tpu_custom_call.1} parent=1 // pred_region
      _
    $region13: #{tpu_custom_call.1} parent=1 // pred_fallthru
      _
    // Predicated region
    $region14: #{tpu_custom_call.1} parent=1 // pred_check
      _
    $region15: #{tpu_custom_call.1} parent=1 // pred_check_branch
      %19 = sbr.rel (0) target = $region17
    $region16: #{tpu_custom_call.1} parent=1 // pred_region
      _
    $region17: #{tpu_custom_call.1} parent=1 // pred_fallthru
      _
    // Predicated region
    $region18: #{tpu_custom_call.1} parent=1 // pred_check
      _
    $region19: #{tpu_custom_call.1} parent=1 // pred_check_branch
      %21 = sbr.rel (0) target = $region21
    $region20: #{tpu_custom_call.1} parent=1 // pred_region
      _
    $region21: #{tpu_custom_call.1} parent=1 // pred_fallthru
      _
    // Predicated region
    $region22: #{tpu_custom_call.1} parent=1 // pred_check
      _
    $region23: #{tpu_custom_call.1} parent=1 // pred_check_branch
      %23 = sbr.rel (0) target = $region25
    $region24: #{tpu_custom_call.1} parent=1 // pred_region
      _
    $region25: #{tpu_custom_call.1} parent=1 // pred_fallthru
      _
    %v24 = vld [vmem:[%s1] sm:$0xf]
    %v25 = vld [vmem:[%s4] sm:$0xff]
    %v26 = vld [vmem:[%s4 + $0x8] sm:$0xff]
    %v27 = vld [vmem:[%s4 + $0x10] sm:$0xff]
    %v28 = vld [vmem:[%s4 + $0x18] sm:$0xff]
    %v29 = vld [vmem:[%s4 + $0x20] sm:$0xff]
    %v30 = vld [vmem:[%s4 + $0x28] sm:$0xff]
    %v31 = vld [vmem:[%s4 + $0x30] sm:$0xff]
    %v32 = vld [vmem:[%s4 + $0x38] sm:$0xff]
    %v33 = vld [vmem:[%s4 + $0x40] sm:$0xff]
    %v34 = vld [vmem:[%s4 + $0x48] sm:$0xff]
    %v35 = vld [vmem:[%s4 + $0x50] sm:$0xff]
    %v36 = vld [vmem:[%s4 + $0x58] sm:$0xff]
    %v37 = vld [vmem:[%s4 + $0x60] sm:$0xff]
    %v38 = vld [vmem:[%s4 + $0x68] sm:$0xff]
    %v39 = vld [vmem:[%s4 + $0x70] sm:$0xff]
    %v40 = vld [vmem:[%s4 + $0x78] sm:$0xff]
    %v41 = vld [vmem:[%s5] sm:$0xf]
    %42 = vmatprep.subr.mxu0 0.0
    %43 = vmatpush1.msra.mxu0 %v25
    %44 = vmatprep.subr.mxu0 0.0
    %45 = vmatpush1.msra.mxu0 %v26
    %46 = vmatprep.subr.mxu0 0.0
    %47 = vmatpush1.msra.mxu0 %v27
    %48 = vmatprep.subr.mxu0 0.0
    %49 = vmatpush1.msra.mxu0 %v28
    %50 = vmatprep.subr.mxu0 0.0
    %51 = vmatpush1.msra.mxu0 %v29
    %52 = vmatprep.subr.mxu0 0.0
    %53 = vmatpush1.msra.mxu0 %v30
    %54 = vmatprep.subr.mxu0 0.0
    %55 = vmatpush1.msra.mxu0 %v31
    %56 = vmatprep.subr.mxu0 0.0
    %57 = vmatpush1.msra.mxu0 %v32
    %58 = vmatprep.subr.mxu0 0.0
    %59 = vmatpush1.msra.mxu0 %v33
    %60 = vmatprep.subr.mxu0 0.0
    %61 = vmatpush1.msra.mxu0 %v34
    %62 = vmatprep.subr.mxu0 0.0
    %63 = vmatpush1.msra.mxu0 %v35
    %64 = vmatprep.subr.mxu0 0.0
    %65 = vmatpush1.msra.mxu0 %v36
    %66 = vmatprep.subr.mxu0 0.0
    %67 = vmatpush1.msra.mxu0 %v37
    %68 = vmatprep.subr.mxu0 0.0
    %69 = vmatpush1.msra.mxu0 %v38
    %70 = vmatprep.subr.mxu0 0.0
    %71 = vmatpush1.msra.mxu0 %v39
    %72 = vmatprep.subr.mxu0 0.0
    %73 = vmatpush1.msra.mxu0 %v40
    %74 = vmatprep.subr.mxu0 0.0
    %75 = vmatpush1.msra.mxu0 0.0
    %76 = vmatprep.subr.mxu0 0.0
    %77 = vmatpush1.msra.mxu0 0.0
    %78 = vmatprep.subr.mxu0 0.0
    %79 = vmatpush1.msra.mxu0 0.0
    %80 = vmatprep.subr.mxu0 0.0
    %81 = vmatpush1.msra.mxu0 0.0
    %82 = vmatprep.subr.mxu0 0.0
    %83 = vmatpush1.msra.mxu0 0.0
    %84 = vmatprep.subr.mxu0 0.0
    %85 = vmatpush1.msra.mxu0 0.0
    %86 = vmatprep.subr.mxu0 0.0
    %87 = vmatpush1.msra.mxu0 0.0
    %88 = vmatprep.subr.mxu0 0.0
    %89 = vmatpush1.msra.mxu0 0.0
    %90 = vmatprep.subr.mxu0 0.0
    %91 = vmatpush1.msra.mxu0 0.0
    %92 = vmatprep.subr.mxu0 0.0
    %93 = vmatpush1.msra.mxu0 0.0
    %94 = vmatprep.subr.mxu0 0.0
    %95 = vmatpush1.msra.mxu0 0.0
    %96 = vmatprep.subr.mxu0 0.0
    %97 = vmatpush1.msra.mxu0 0.0
    %98 = vmatprep.subr.mxu0 0.0
    %99 = vmatpush1.msra.mxu0 0.0
    %100 = vmatprep.subr.mxu0 0.0
    %101 = vmatpush1.msra.mxu0 0.0
    %102 = vmatprep.subr.mxu0 0.0
    %103 = vmatpush1.msra.mxu0 0.0
    %104 = vmatprep.subr.mxu0 0.0
    %105 = vmatpush1.msra.mxu0 0.0
    %106 = vmatprep.mubr.f32.mxu0 0.0
    %107 = vmatmul.mubr.f32.gmra.mrb[0].mxu0 %v24
    %v108 = vpop.f32.mrb[0].mxu0
    %v109 = vadd.f32 0.0, %v108
    %v110 = vpop.f32.mrb[0].mxu0
    %111 = vdwg.mxu0
    %v112 = vmul.f32 %v109, 0.03125
    %v113 = vmul.f32 %v24, %v24
    %114 = vmatprep.subr.mxu0 0.0
    %115 = vmatpush1.msra.mxu0 %v25
    %116 = vmatprep.subr.mxu0 0.0
    %117 = vmatpush1.msra.mxu0 %v26
    %118 = vmatprep.subr.mxu0 0.0
    %119 = vmatpush1.msra.mxu0 %v27
    %120 = vmatprep.subr.mxu0 0.0
    %121 = vmatpush1.msra.mxu0 %v28
    %122 = vmatprep.subr.mxu0 0.0
    %123 = vmatpush1.msra.mxu0 %v29
    %124 = vmatprep.subr.mxu0 0.0
    %125 = vmatpush1.msra.mxu0 %v30
    %126 = vmatprep.subr.mxu0 0.0
    %127 = vmatpush1.msra.mxu0 %v31
    %128 = vmatprep.subr.mxu0 0.0
    %129 = vmatpush1.msra.mxu0 %v32
    %130 = vmatprep.subr.mxu0 0.0
    %131 = vmatpush1.msra.mxu0 %v33
    %132 = vmatprep.subr.mxu0 0.0
    %133 = vmatpush1.msra.mxu0 %v34
    %134 = vmatprep.subr.mxu0 0.0
    %135 = vmatpush1.msra.mxu0 %v35
    %136 = vmatprep.subr.mxu0 0.0
    %137 = vmatpush1.msra.mxu0 %v36
    %138 = vmatprep.subr.mxu0 0.0
    %139 = vmatpush1.msra.mxu0 %v37
    %140 = vmatprep.subr.mxu0 0.0
    %141 = vmatpush1.msra.mxu0 %v38
    %142 = vmatprep.subr.mxu0 0.0
    %143 = vmatpush1.msra.mxu0 %v39
    %144 = vmatprep.subr.mxu0 0.0
    %145 = vmatpush1.msra.mxu0 %v40
    %146 = vmatprep.subr.mxu0 0.0
    %147 = vmatpush1.msra.mxu0 0.0
    %148 = vmatprep.subr.mxu0 0.0
    %149 = vmatpush1.msra.mxu0 0.0
    %150 = vmatprep.subr.mxu0 0.0
    %151 = vmatpush1.msra.mxu0 0.0
    %152 = vmatprep.subr.mxu0 0.0
    %153 = vmatpush1.msra.mxu0 0.0
    %154 = vmatprep.subr.mxu0 0.0
    %155 = vmatpush1.msra.mxu0 0.0
    %156 = vmatprep.subr.mxu0 0.0
    %157 = vmatpush1.msra.mxu0 0.0
    %158 = vmatprep.subr.mxu0 0.0
    %159 = vmatpush1.msra.mxu0 0.0
    %160 = vmatprep.subr.mxu0 0.0
    %161 = vmatpush1.msra.mxu0 0.0
    %162 = vmatprep.subr.mxu0 0.0
    %163 = vmatpush1.msra.mxu0 0.0
    %164 = vmatprep.subr.mxu0 0.0
    %165 = vmatpush1.msra.mxu0 0.0
    %166 = vmatprep.subr.mxu0 0.0
    %167 = vmatpush1.msra.mxu0 0.0
    %168 = vmatprep.subr.mxu0 0.0
    %169 = vmatpush1.msra.mxu0 0.0
    %170 = vmatprep.subr.mxu0 0.0
    %171 = vmatpush1.msra.mxu0 0.0
    %172 = vmatprep.subr.mxu0 0.0
    %173 = vmatpush1.msra.mxu0 0.0
    %174 = vmatprep.subr.mxu0 0.0
    %175 = vmatpush1.msra.mxu0 0.0
    %176 = vmatprep.subr.mxu0 0.0
    %177 = vmatpush1.msra.mxu0 0.0
    %178 = vmatprep.mubr.f32.mxu0 0.0
    %179 = vmatmul.mubr.f32.gmra.mrb[0].mxu0 %v113
    %v180 = vpop.f32.mrb[0].mxu0
    %v181 = vadd.f32 0.0, %v180
    %v182 = vpop.f32.mrb[0].mxu0
    %183 = vdwg.mxu0
    %v184 = vmul.f32 %v181, 0.03125
    %v185 = vmul.f32 %v112, %v112
    %v186 = vsub.f32 %v184, %v185
    %v187 = vmax.f32 %v186, 0.0
    %v188 = vadd.f32 %v187, 1e-05
    %v189 = vrsqrt.pop %v188
    %vm190 = vcmask 31744
    %v192 = vsel %vm190, %v112, 0
    %vm194 = vcmask 1043456
    %v196 = vsel %vm194, %v41, 0
    %198 = vmatprep.subr.mxu0 0.0
    %199 = vmatpush1.msra.mxu0 %v196
    %200 = vmatprep.subr.mxu0 0.0
    %201 = vmatpush1.msra.mxu0 0.0
    %202 = vmatprep.subr.mxu0 0.0
    %203 = vmatpush1.msra.mxu0 0.0
    %204 = vmatprep.subr.mxu0 0.0
    %205 = vmatpush1.msra.mxu0 0.0
    %206 = vmatprep.subr.mxu0 0.0
    %207 = vmatpush1.msra.mxu0 0.0
    %208 = vmatprep.subr.mxu0 0.0
    %209 = vmatpush1.msra.mxu0 0.0
    %210 = vmatprep.subr.mxu0 0.0
    %211 = vmatpush1.msra.mxu0 0.0
    %212 = vmatprep.subr.mxu0 0.0
    %213 = vmatpush1.msra.mxu0 0.0
    %214 = vmatprep.subr.mxu0 0.0
    %215 = vmatpush1.msra.mxu0 0.0
    %216 = vmatprep.subr.mxu0 0.0
    %217 = vmatpush1.msra.mxu0 0.0
    %218 = vmatprep.subr.mxu0 0.0
    %219 = vmatpush1.msra.mxu0 0.0
    %220 = vmatprep.subr.mxu0 0.0
    %221 = vmatpush1.msra.mxu0 0.0
    %222 = vmatprep.subr.mxu0 0.0
    %223 = vmatpush1.msra.mxu0 0.0
    %224 = vmatprep.subr.mxu0 0.0
    %225 = vmatpush1.msra.mxu0 0.0
    %226 = vmatprep.subr.mxu0 0.0
    %227 = vmatpush1.msra.mxu0 0.0
    %228 = vmatprep.subr.mxu0 0.0
    %229 = vmatpush1.msra.mxu0 0.0
    %230 = vmatprep.subr.mxu0 0.0
    %231 = vmatpush1.msra.mxu0 0.0
    %232 = vmatprep.subr.mxu0 0.0
    %233 = vmatpush1.msra.mxu0 0.0
    %234 = vmatprep.subr.mxu0 0.0
    %235 = vmatpush1.msra.mxu0 0.0
    %236 = vmatprep.subr.mxu0 0.0
    %237 = vmatpush1.msra.mxu0 0.0
    %238 = vmatprep.subr.mxu0 0.0
    %239 = vmatpush1.msra.mxu0 0.0
    %240 = vmatprep.subr.mxu0 0.0
    %241 = vmatpush1.msra.mxu0 0.0
    %242 = vmatprep.subr.mxu0 0.0
    %243 = vmatpush1.msra.mxu0 0.0
    %244 = vmatprep.subr.mxu0 0.0
    %245 = vmatpush1.msra.mxu0 0.0
    %246 = vmatprep.subr.mxu0 0.0
    %247 = vmatpush1.msra.mxu0 0.0
    %248 = vmatprep.subr.mxu0 0.0
    %249 = vmatpush1.msra.mxu0 0.0
    %250 = vmatprep.subr.mxu0 0.0
    %251 = vmatpush1.msra.mxu0 0.0
    %252 = vmatprep.subr.mxu0 0.0
    %253 = vmatpush1.msra.mxu0 0.0
    %254 = vmatprep.subr.mxu0 0.0
    %255 = vmatpush1.msra.mxu0 0.0
    %256 = vmatprep.subr.mxu0 0.0
    %257 = vmatpush1.msra.mxu0 0.0
    %258 = vmatprep.subr.mxu0 0.0
    %259 = vmatpush1.msra.mxu0 0.0
    %260 = vmatprep.subr.mxu0 0.0
    %261 = vmatpush1.msra.mxu0 0.0
    %262 = vmatprep.mubr.f32.mxu0 0.0
    %263 = vmatmul.mubr.f32.gmra.mrb[0].mxu0 %v192
    %v264 = vpop.f32.mrb[0].mxu0
    %v265 = vadd.f32 0.0, %v264
    %v266 = vpop.f32.mrb[0].mxu0
    %267 = vdwg.mxu0
    %v269 = vsel %vm190, %v189, 0
    %271 = vmatprep.subr.mxu0 0.0
    %272 = vmatpush1.msra.mxu0 %v196
    %273 = vmatprep.subr.mxu0 0.0
    %274 = vmatpush1.msra.mxu0 0.0
    %275 = vmatprep.subr.mxu0 0.0
    %276 = vmatpush1.msra.mxu0 0.0
    %277 = vmatprep.subr.mxu0 0.0
    %278 = vmatpush1.msra.mxu0 0.0
    %279 = vmatprep.subr.mxu0 0.0
    %280 = vmatpush1.msra.mxu0 0.0
    %281 = vmatprep.subr.mxu0 0.0
    %282 = vmatpush1.msra.mxu0 0.0
    %283 = vmatprep.subr.mxu0 0.0
    %284 = vmatpush1.msra.mxu0 0.0
    %285 = vmatprep.subr.mxu0 0.0
    %286 = vmatpush1.msra.mxu0 0.0
    %287 = vmatprep.subr.mxu0 0.0
    %288 = vmatpush1.msra.mxu0 0.0
    %289 = vmatprep.subr.mxu0 0.0
    %290 = vmatpush1.msra.mxu0 0.0
    %291 = vmatprep.subr.mxu0 0.0
    %292 = vmatpush1.msra.mxu0 0.0
    %293 = vmatprep.subr.mxu0 0.0
    %294 = vmatpush1.msra.mxu0 0.0
    %295 = vmatprep.subr.mxu0 0.0
    %296 = vmatpush1.msra.mxu0 0.0
    %297 = vmatprep.subr.mxu0 0.0
    %298 = vmatpush1.msra.mxu0 0.0
    %299 = vmatprep.subr.mxu0 0.0
    %300 = vmatpush1.msra.mxu0 0.0
    %301 = vmatprep.subr.mxu0 0.0
    %302 = vmatpush1.msra.mxu0 0.0
    %303 = vmatprep.subr.mxu0 0.0
    %304 = vmatpush1.msra.mxu0 0.0
    %305 = vmatprep.subr.mxu0 0.0
    %306 = vmatpush1.msra.mxu0 0.0
    %307 = vmatprep.subr.mxu0 0.0
    %308 = vmatpush1.msra.mxu0 0.0
    %309 = vmatprep.subr.mxu0 0.0
    %310 = vmatpush1.msra.mxu0 0.0
    %311 = vmatprep.subr.mxu0 0.0
    %312 = vmatpush1.msra.mxu0 0.0
    %313 = vmatprep.subr.mxu0 0.0
    %314 = vmatpush1.msra.mxu0 0.0
    %315 = vmatprep.subr.mxu0 0.0
    %316 = vmatpush1.msra.mxu0 0.0
    %317 = vmatprep.subr.mxu0 0.0
    %318 = vmatpush1.msra.mxu0 0.0
    %319 = vmatprep.subr.mxu0 0.0
    %320 = vmatpush1.msra.mxu0 0.0
    %321 = vmatprep.subr.mxu0 0.0
    %322 = vmatpush1.msra.mxu0 0.0
    %323 = vmatprep.subr.mxu0 0.0
    %324 = vmatpush1.msra.mxu0 0.0
    %325 = vmatprep.subr.mxu0 0.0
    %326 = vmatpush1.msra.mxu0 0.0
    %327 = vmatprep.subr.mxu0 0.0
    %328 = vmatpush1.msra.mxu0 0.0
    %329 = vmatprep.subr.mxu0 0.0
    %330 = vmatpush1.msra.mxu0 0.0
    %331 = vmatprep.subr.mxu0 0.0
    %332 = vmatpush1.msra.mxu0 0.0
    %333 = vmatprep.subr.mxu0 0.0
    %334 = vmatpush1.msra.mxu0 0.0
    %335 = vmatprep.mubr.f32.mxu0 0.0
    %336 = vmatmul.mubr.f32.gmra.mrb[0].mxu0 %v269
    %v337 = vpop.f32.mrb[0].mxu0
    %v338 = vadd.f32 0.0, %v337
    %v339 = vpop.f32.mrb[0].mxu0
    %340 = vdwg.mxu0
    %v341 = vsub.f32 %v24, %v265
    %v342 = vmul.f32 %v341, %v338
    %v343 = vld [vmem:[%s2] sm:$0x1]
    %v345 = vlaneseq
    %v346 = vshrl.u32 %v345, 7
    %v347 = vsub.s32 0, %v346
    %v348 = vrot.slane %v343, %v347
    %v350 = vmul.f32 %v342, %v348
    %v351 = vld [vmem:[%s3] sm:$0x1]
    %v353 = vlaneseq
    %v354 = vshrl.u32 %v353, 7
    %v355 = vsub.s32 0, %v354
    %v356 = vrot.slane %v351, %v355
    %v358 = vadd.f32 %v350, %v356
    %v359 = vld [vmem:[%s0] sm:$0xf]
    %v360 = vadd.f32 %v359, %v358
    %361 = vst [vmem:[#allocation2] sm:$0xf] %v360
    // Predicated region
    $region26: #{tpu_custom_call.1} parent=1 // pred_check
      _
    $region27: #{tpu_custom_call.1} parent=1 // pred_check_branch
      %363 = sbr.rel (0) target = $region29
    $region28: #{tpu_custom_call.1} parent=1 // pred_region
      %s365 = ssub.s32 64, 64
      %366 = vsyncadd [#allocation3], %s365
      %s368 = sshll.u32 [#allocation2], 4
      %s369 = int_to_ptr.vmem [resolvable:$true] %s368
      %371 = dma.vmem_to_hbm [thread:$0]  %s369, 64, %s6, [#allocation3]
    $region29: #{tpu_custom_call.1} parent=1 // pred_fallthru
      _
    // Predicated region
    $region30: #{tpu_custom_call.1} parent=1 // pred_check
      _
    $region31: #{tpu_custom_call.1} parent=1 // pred_check_branch
      %373 = sbr.rel (0) target = $region33
    $region32: #{tpu_custom_call.1} parent=1 // pred_region
      %374 = dma.done [#allocation3], 64
    $region33: #{tpu_custom_call.1} parent=1 // pred_fallthru
      _
    %375 = vsyncpa [#allocation3], 1

</llo_original>
